<compile_context>
chip_gen: v5e
topology: v5e:2x2
jax: 0.10.0
libtpu: 0.0.40
codegen_flags: <defaults>
</compile_context>

<pallas_src>
import functools

import jax
import jax.numpy as jnp
from jax.experimental import pallas as pl
from jax.experimental.pallas import tpu as pltpu


def _round_up(a: int, b: int) -> int:
    return (a + b - 1) // b * b


# ----------------------------------------------------------------------------
# Kernel 1: feature transform + left D^{-1/2} scaling
#   hs[j, f] = dinv[j] * sum_m x[j, m] * W[m, f]
# ----------------------------------------------------------------------------
def _gcn_feat_kernel(x_ref, w_ref, dinv_ref, hs_ref):
    h = jnp.dot(x_ref[...], w_ref[...], preferred_element_type=jnp.float32)
    hs_ref[...] = (dinv_ref[...] * h).astype(hs_ref.dtype)


# ----------------------------------------------------------------------------
# Kernel 2: neighborhood aggregation (transposed contraction) + finalize
#   y[i, f] = dinv[i] * sum_j graph[j, i] * hs[j, f] + bias[f]
# Grid = (rows_i, contraction_k); output tile (TM, Fp) stays resident across
# the k axis with an f32 accumulator in VMEM scratch.
# ----------------------------------------------------------------------------
def _gcn_agg_kernel(g_ref, hs_ref, dinv_ref, b_ref, y_ref, acc_ref):
    k = pl.program_id(1)

    @pl.when(k == 0)
    def _():
        acc_ref[...] = jnp.zeros_like(acc_ref)

    # g_ref is the (TK, TM) block of graph with rows = contraction index j and
    # columns = output rows i; contracting axis 0 of both operands computes
    # graph^T @ hs without ever materializing a transpose.
    acc_ref[...] += jax.lax.dot_general(
        g_ref[...], hs_ref[...],
        dimension_numbers=(((0,), (0,)), ((), ())),
        preferred_element_type=jnp.float32)

    @pl.when(k == pl.num_programs(1) - 1)
    def _():
        y_ref[...] = (dinv_ref[...] * acc_ref[...] + b_ref[...]).astype(y_ref.dtype)


# ----------------------------------------------------------------------------
# Wrapper
# ----------------------------------------------------------------------------
@functools.partial(jax.jit, static_argnames=())
def gcn_forward(x, graph, weight, bias):
    N, M = x.shape
    F = weight.shape[1]
    assert graph.shape == (N, N)

    x = x.astype(jnp.float32)
    graph = graph.astype(jnp.float32)
    weight = weight.astype(jnp.float32)

    # Degrees (column sums of graph) and D^{-1/2}, hoisted to one XLA pass.
    deg = jnp.sum(graph, axis=0)
    dinv = jnp.where(deg > 0, jax.lax.rsqrt(deg), 0.0).astype(jnp.float32)

    # --- tile plan ------------------------------------------------------
    LANE = 128
    Fp = _round_up(F, LANE)                 # lane-dense output
    if N >= 512:
        TM, TK = 256, 512                   # fits v7x 32 MiB scoped VMEM easily
    elif N >= 256:
        TM, TK = 256, 256
    else:
        TM = TK = _round_up(N, 8)           # tiny problems: single tile
    Np = _round_up(N, max(TM, TK))          # TM divides TK in all branches

    # --- pad inputs (zeros contribute nothing to the aggregation) -------
    xp = jnp.zeros((Np, M), jnp.float32).at[:N, :].set(x)
    gp = jnp.zeros((Np, Np), jnp.float32).at[:N, :N].set(graph)
    wp = jnp.zeros((M, Fp), jnp.float32).at[:, :F].set(weight)
    bp = jnp.zeros((1, Fp), jnp.float32)
    if bias is not None:
        bp = bp.at[0, :F].set(bias.astype(jnp.float32))
    dinv2d = jnp.zeros((Np, 1), jnp.float32).at[:N, 0].set(dinv)

    # --- kernel 1: hs = D^{-1/2} (x @ W), row-tiled ----------------------
    hs = pl.pallas_call(
        _gcn_feat_kernel,
        out_shape=jax.ShapeDtypeStruct((Np, Fp), jnp.float32),
        grid_spec=pltpu.PrefetchScalarGridSpec(
            num_scalar_prefetch=0,
            grid=(Np // TK,),
            in_specs=[
                pl.BlockSpec((TK, M), lambda i: (i, 0)),    # x rows
                pl.BlockSpec((M, Fp), lambda i: (0, 0)),    # full weight
                pl.BlockSpec((TK, 1), lambda i: (i, 0)),    # dinv rows
            ],
            out_specs=pl.BlockSpec((TK, Fp), lambda i: (i, 0)),
        ),
        compiler_params=pltpu.CompilerParams(
            dimension_semantics=("parallel",)),
    )(xp, wp, dinv2d)

    # --- kernel 2: y = D^{-1/2} (graph^T @ hs) + bias, tiled (i, k) ------
    y_padded = pl.pallas_call(
        _gcn_agg_kernel,
        out_shape=jax.ShapeDtypeStruct((Np, Fp), jnp.float32),
        grid_spec=pltpu.PrefetchScalarGridSpec(
            num_scalar_prefetch=0,
            grid=(Np // TM, Np // TK),
            in_specs=[
                pl.BlockSpec((TK, TM), lambda i, k: (k, i)),   # graph block
                pl.BlockSpec((TK, Fp), lambda i, k: (k, 0)),   # hs block
                pl.BlockSpec((TM, 1), lambda i, k: (i, 0)),    # dinv (out rows)
                pl.BlockSpec((1, Fp), lambda i, k: (0, 0)),    # bias
            ],
            out_specs=pl.BlockSpec((TM, Fp), lambda i, k: (i, 0)),
            scratch_shapes=[pltpu.VMEM((TM, Fp), jnp.float32)],
        ),
        compiler_params=pltpu.CompilerParams(
            dimension_semantics=("parallel", "arbitrary")),
    )(gp, hs, dinv2d, bp)

    return y_padded[:N, :F]


def _reference(x, graph, weight, bias):
    deg = jnp.sum(graph, axis=0)
    dinv = jnp.where(deg > 0, deg ** -0.5, 0.0)
    norm = dinv[:, None] * graph.T * dinv[None, :]
    return norm @ (x @ weight) + bias[None, :]


if __name__ == "__main__":
    key = jax.random.PRNGKey(0)
    k_x, k_g, k_w, k_b = jax.random.split(key, 4)

    N = 8             # number of nodes
    in_features = 16
    out_features = 32

    # Node features.
    x = jax.random.normal(k_x, (N, in_features), dtype=jnp.float32)

    # Graph with positive edge weights + self loops (all degrees > 0).
    g_rand = jax.random.uniform(k_g, (N, N), dtype=jnp.float32)
    graph = jnp.where(g_rand > 0.5, g_rand, 0.0) + jnp.eye(N, dtype=jnp.float32)

    # Parameters: xavier_normal_-like weight, small random bias to exercise
    # the bias-add path (original module inits it to zero).
    std = (2.0 / (in_features + out_features)) ** 0.5
    weight = std * jax.random.normal(k_w, (in_features, out_features),
                                     dtype=jnp.float32)
    bias = 0.1 * jax.random.normal(k_b, (out_features,), dtype=jnp.float32)

    y = gcn_forward(x, graph, weight, bias)
    jax.block_until_ready(y)

    y_ref = _reference(x, graph, weight, bias)
    assert y.shape == (N, out_features)
    assert jnp.allclose(y, y_ref, atol=1e-4, rtol=1e-4), float(
        jnp.max(jnp.abs(y - y_ref)))

    print("KERNEL_OK")
</pallas_src>

<mosaic_0001>
module attributes {stable_mosaic.version = 11 : i64} {
  func.func @_gcn_agg_kernel(%arg0: i32, %arg1: i32, %arg2: memref<8x8xf32, #tpu.memory_space<vmem>>, %arg3: memref<8x128xf32, #tpu.memory_space<vmem>>, %arg4: memref<8x1xf32, #tpu.memory_space<vmem>>, %arg5: memref<1x128xf32, #tpu.memory_space<vmem>>, %arg6: memref<8x128xf32, #tpu.memory_space<vmem>>, %arg7: memref<8x128xf32, #tpu.memory_space<vmem>>) attributes {dimension_semantics = [#tpu.dimension_semantics<parallel>, #tpu.dimension_semantics<arbitrary>], iteration_bounds = array<i64: 1, 1>, scalar_prefetch = 0 : i64, scratch_operands = 1 : i64, tpu.core_type = #tpu.core_type<tc>, window_params = [{transform_indices = @transform_0, window_bounds = array<i64: 8, 8>}, {transform_indices = @transform_1, window_bounds = array<i64: 8, 128>}, {transform_indices = @transform_2, window_bounds = array<i64: 8, 1>}, {pipeline_mode = #tpu.pipeline_mode<synchronous>, transform_indices = @transform_3, window_bounds = array<i64: 1, 128>}, {transform_indices = @transform_4, window_bounds = array<i64: 8, 128>}]} {
    %c0_i32 = arith.constant 0 : i32
    %0 = arith.cmpi eq, %arg1, %c0_i32 : i32
    %1 = arith.extui %0 : i1 to i32
    %c0_i32_0 = arith.constant 0 : i32
    %2 = arith.cmpi ne, %1, %c0_i32_0 : i32
    scf.if %2 {
      %cst_10 = arith.constant 0.000000e+00 : f32
      %12 = vector.broadcast %cst_10 : f32 to vector<8x128xf32>
      %c0_11 = arith.constant 0 : index
      %c0_12 = arith.constant 0 : index
      %13 = vector.load %arg7[%c0_11, %c0_12] : memref<8x128xf32, #tpu.memory_space<vmem>>, vector<8x128xf32>
      tpu.vector_store %arg7[%c0_11, %c0_12], %12 {strides = array<i32>} : memref<8x128xf32, #tpu.memory_space<vmem>>, vector<8x128xf32>,
    } else {
    }
    %c0 = arith.constant 0 : index
    %c0_1 = arith.constant 0 : index
    %3 = vector.load %arg7[%c0, %c0_1] : memref<8x128xf32, #tpu.memory_space<vmem>>, vector<8x128xf32>
    %c0_2 = arith.constant 0 : index
    %c0_3 = arith.constant 0 : index
    %4 = vector.load %arg2[%c0_2, %c0_3] : memref<8x8xf32, #tpu.memory_space<vmem>>, vector<8x8xf32>
    %c0_4 = arith.constant 0 : index
    %c0_5 = arith.constant 0 : index
    %5 = vector.load %arg3[%c0_4, %c0_5] : memref<8x128xf32, #tpu.memory_space<vmem>>, vector<8x128xf32>
    %cst = arith.constant dense<0.000000e+00> : vector<8x128xf32>
    %6 = tpu.matmul %4, %5, %cst {dimension_numbers = #tpu.dot_dimension_numbers<[0], [0], [1], [1], [0, 1, 1, 1], [], []>} : vector<8x8xf32>, vector<8x128xf32>, vector<8x128xf32> -> vector<8x128xf32>
    %7 = arith.addf %3, %6 : vector<8x128xf32>
    %c0_6 = arith.constant 0 : index
    %c0_7 = arith.constant 0 : index
    %8 = vector.load %arg7[%c0_6, %c0_7] : memref<8x128xf32, #tpu.memory_space<vmem>>, vector<8x128xf32>
    tpu.vector_store %arg7[%c0_6, %c0_7], %7 {strides = array<i32>} : memref<8x128xf32, #tpu.memory_space<vmem>>, vector<8x128xf32>,
    %c0_i32_8 = arith.constant 0 : i32
    %9 = arith.cmpi eq, %arg1, %c0_i32_8 : i32
    %10 = arith.extui %9 : i1 to i32
    %c0_i32_9 = arith.constant 0 : i32
    %11 = arith.cmpi ne, %10, %c0_i32_9 : i32
    scf.if %11 {
      %c0_10 = arith.constant 0 : index
      %c0_11 = arith.constant 0 : index
      %12 = vector.load %arg4[%c0_10, %c0_11] : memref<8x1xf32, #tpu.memory_space<vmem>>, vector<8x1xf32>
      %c0_12 = arith.constant 0 : index
      %c0_13 = arith.constant 0 : index
      %13 = vector.load %arg7[%c0_12, %c0_13] : memref<8x128xf32, #tpu.memory_space<vmem>>, vector<8x128xf32>
      %14 = vector.broadcast %12 : vector<8x1xf32> to vector<8x128xf32>
      %15 = arith.mulf %14, %13 : vector<8x128xf32>
      %c0_14 = arith.constant 0 : index
      %c0_15 = arith.constant 0 : index
      %16 = vector.load %arg5[%c0_14, %c0_15] : memref<1x128xf32, #tpu.memory_space<vmem>>, vector<1x128xf32>
      %17 = vector.broadcast %16 : vector<1x128xf32> to vector<8x128xf32>
      %18 = arith.addf %15, %17 : vector<8x128xf32>
      %c0_16 = arith.constant 0 : index
      %c0_17 = arith.constant 0 : index
      %19 = vector.load %arg6[%c0_16, %c0_17] : memref<8x128xf32, #tpu.memory_space<vmem>>, vector<8x128xf32>
      tpu.vector_store %arg6[%c0_16, %c0_17], %18 {strides = array<i32>} : memref<8x128xf32, #tpu.memory_space<vmem>>, vector<8x128xf32>,
    } else {
    }
    return
  }
  func.func @transform_0(%arg0: i32, %arg1: i32) -> (i32, i32) {
    %c0_i32 = arith.constant 0 : i32
    return %arg1, %arg0 : i32, i32
  }
  func.func @transform_1(%arg0: i32, %arg1: i32) -> (i32, i32) {
    %c0_i32 = arith.constant 0 : i32
    %c0_i32_0 = arith.constant 0 : i32
    return %arg1, %c0_i32 : i32, i32
  }
  func.func @transform_2(%arg0: i32, %arg1: i32) -> (i32, i32) {
    %c0_i32 = arith.constant 0 : i32
    %c0_i32_0 = arith.constant 0 : i32
    return %arg0, %c0_i32 : i32, i32
  }
  func.func @transform_3(%arg0: i32, %arg1: i32) -> (i32, i32) {
    %c0_i32 = arith.constant 0 : i32
    %c0_i32_0 = arith.constant 0 : i32
    %c0_i32_1 = arith.constant 0 : i32
    return %c0_i32, %c0_i32_0 : i32, i32
  }
  func.func @transform_4(%arg0: i32, %arg1: i32) -> (i32, i32) {
    %c0_i32 = arith.constant 0 : i32
    %c0_i32_0 = arith.constant 0 : i32
    return %arg0, %c0_i32 : i32, i32
  }
}

module attributes {stable_mosaic.version = 11 : i64} {
  func.func @_gcn_feat_kernel(%arg0: i32, %arg1: memref<8x16xf32, #tpu.memory_space<vmem>>, %arg2: memref<16x128xf32, #tpu.memory_space<vmem>>, %arg3: memref<8x1xf32, #tpu.memory_space<vmem>>, %arg4: memref<8x128xf32, #tpu.memory_space<vmem>>) attributes {dimension_semantics = [#tpu.dimension_semantics<parallel>], iteration_bounds = array<i64: 1>, scalar_prefetch = 0 : i64, scratch_operands = 0 : i64, tpu.core_type = #tpu.core_type<tc>, window_params = [{transform_indices = @transform_0, window_bounds = array<i64: 8, 16>}, {pipeline_mode = #tpu.pipeline_mode<synchronous>, transform_indices = @transform_1, window_bounds = array<i64: 16, 128>}, {transform_indices = @transform_2, window_bounds = array<i64: 8, 1>}, {transform_indices = @transform_3, window_bounds = array<i64: 8, 128>}]} {
    %c0 = arith.constant 0 : index
    %c0_0 = arith.constant 0 : index
    %0 = vector.load %arg1[%c0, %c0_0] : memref<8x16xf32, #tpu.memory_space<vmem>>, vector<8x16xf32>
    %c0_1 = arith.constant 0 : index
    %c0_2 = arith.constant 0 : index
    %1 = vector.load %arg2[%c0_1, %c0_2] : memref<16x128xf32, #tpu.memory_space<vmem>>, vector<16x128xf32>
    %cst = arith.constant dense<0.000000e+00> : vector<8x128xf32>
    %2 = tpu.matmul %0, %1, %cst {dimension_numbers = #tpu.dot_dimension_numbers<[1], [0], [0], [1], [0, 0, 1, 1], [], []>} : vector<8x16xf32>, vector<16x128xf32>, vector<8x128xf32> -> vector<8x128xf32>
    %c0_3 = arith.constant 0 : index
    %c0_4 = arith.constant 0 : index
    %3 = vector.load %arg3[%c0_3, %c0_4] : memref<8x1xf32, #tpu.memory_space<vmem>>, vector<8x1xf32>
    %4 = vector.broadcast %3 : vector<8x1xf32> to vector<8x128xf32>
    %5 = arith.mulf %4, %2 : vector<8x128xf32>
    %c0_5 = arith.constant 0 : index
    %c0_6 = arith.constant 0 : index
    %6 = vector.load %arg4[%c0_5, %c0_6] : memref<8x128xf32, #tpu.memory_space<vmem>>, vector<8x128xf32>
    tpu.vector_store %arg4[%c0_5, %c0_6], %5 {strides = array<i32>} : memref<8x128xf32, #tpu.memory_space<vmem>>, vector<8x128xf32>,
    return
  }
  func.func @transform_0(%arg0: i32) -> (i32, i32) {
    %c0_i32 = arith.constant 0 : i32
    %c0_i32_0 = arith.constant 0 : i32
    return %arg0, %c0_i32 : i32, i32
  }
  func.func @transform_1(%arg0: i32) -> (i32, i32) {
    %c0_i32 = arith.constant 0 : i32
    %c0_i32_0 = arith.constant 0 : i32
    %c0_i32_1 = arith.constant 0 : i32
    return %c0_i32, %c0_i32_0 : i32, i32
  }
  func.func @transform_2(%arg0: i32) -> (i32, i32) {
    %c0_i32 = arith.constant 0 : i32
    %c0_i32_0 = arith.constant 0 : i32
    return %arg0, %c0_i32 : i32, i32
  }
  func.func @transform_3(%arg0: i32) -> (i32, i32) {
    %c0_i32 = arith.constant 0 : i32
    %c0_i32_0 = arith.constant 0 : i32
    return %arg0, %c0_i32 : i32, i32
  }
}

</mosaic_0001>

<llo_original>
// kernel: gcn_forward.2
$region0: #{gcn_forward.2}
  #allocation0 [shape = 'u32[]', space=smem, size = 0x4, offset = 0x4, fixed_abs, tag = 'smem constant byte address 0x4 - core index']
  #allocation1 [shape = 'u32[72,128]{1,0:T(1,128)}', space=vmem, size = 0x9000, scoped, tag = 'internal scratch']
  %s0 = inlined_call_operand.vmem [shape: f32[8,16], index: 0, kind: input, shape index: {}]
  %s1 = inlined_call_operand.vmem [shape: f32[16,128], index: 1, kind: input, shape index: {}]
  %s2 = inlined_call_operand.vmem [shape: f32[8,1], index: 2, kind: input, shape index: {}]
  %s3 = inlined_call_operand.vmem [shape: f32[8,128], index: 3, kind: output, shape index: {}]
  %s4 = sld [smem:[#allocation0]]
  $region22: #{gcn_forward.2} parent=0
    _
  %s6 = ssub.s32 1, %s4
  %s7 = scalar_select 0, %s6, %s4
  // Predicated region
  $region2: #{gcn_forward.2} parent=0 // pred_check
    _
  $region3: #{gcn_forward.2} parent=0 // pred_check_branch
    %9 = sbr.rel (0) target = $region5
  $region4: #{gcn_forward.2} parent=0 // pred_region
    _
  $region5: #{gcn_forward.2} parent=0 // pred_fallthru
    _
  // Predicated region
  $region6: #{gcn_forward.2} parent=0 // pred_check
    _
  $region7: #{gcn_forward.2} parent=0 // pred_check_branch
    %11 = sbr.rel (0) target = $region9
  $region8: #{gcn_forward.2} parent=0 // pred_region
    _
  $region9: #{gcn_forward.2} parent=0 // pred_fallthru
    _
  // Predicated region
  $region10: #{gcn_forward.2} parent=0 // pred_check
    _
  $region11: #{gcn_forward.2} parent=0 // pred_check_branch
    %13 = sbr.rel (0) target = $region13
  $region12: #{gcn_forward.2} parent=0 // pred_region
    _
  $region13: #{gcn_forward.2} parent=0 // pred_fallthru
    _
  %v14 = vld [vmem:[%s0] sm:$0xff]
  %v15 = vld [vmem:[%s1] sm:$0xff]
  %v16 = vld [vmem:[%s1 + $0x8] sm:$0xff]
  %vm17 = vcmask 130048
  %v19 = vsel %vm17, %v14, 0
  %21 = vmatpush.msra.mxu0 0.0
  %22 = vmatpush.msra.mxu0 0.0
  %23 = vmatpush.msra.mxu0 0.0
  %24 = vmatpush.msra.mxu0 0.0
  %25 = vmatpush.msra.mxu0 0.0
  %26 = vmatpush.msra.mxu0 0.0
  %27 = vmatpush.msra.mxu0 0.0
  %28 = vmatpush.msra.mxu0 0.0
  %29 = vmatpush.msra.mxu0 0.0
  %30 = vmatpush.msra.mxu0 0.0
  %31 = vmatpush.msra.mxu0 0.0
  %32 = vmatpush.msra.mxu0 0.0
  %33 = vmatpush.msra.mxu0 0.0
  %34 = vmatpush.msra.mxu0 0.0
  %35 = vmatpush.msra.mxu0 %v16
  %36 = vmatpush.msra.mxu0 %v15
  %37 = vmatmul.f32.gmra.mxu0 %v19
  %v38 = vpop.f32.mrf.mxu0
  %v39 = vadd.f32 0.0, %v38
  %40 = vdwg.mxu0
  %v41 = vld [vmem:[%s2] sm:$0xff]
  %43 = vset.pattern.permute.xlu0 0
  %44 = vperm.xlu0 %43, %v41
  %v45 = vpop.permute.xlu0 %44
  %v47 = vmul.f32 %v45, %v39
  %48 = vst [vmem:[%s3] sm:$0xff] %v47
  // Predicated region
  $region14: #{gcn_forward.2} parent=0 // pred_check
    _
  $region15: #{gcn_forward.2} parent=0 // pred_check_branch
    %50 = sbr.rel (0) target = $region17
  $region16: #{gcn_forward.2} parent=0 // pred_region
    _
  $region17: #{gcn_forward.2} parent=0 // pred_fallthru
    _
  // Predicated region
  $region18: #{gcn_forward.2} parent=0 // pred_check
    _
  $region19: #{gcn_forward.2} parent=0 // pred_check_branch
    %52 = sbr.rel (0) target = $region21
  $region20: #{gcn_forward.2} parent=0 // pred_region
    _
  $region21: #{gcn_forward.2} parent=0 // pred_fallthru
    _

// kernel: gcn_forward.3
$region0: #{gcn_forward.3}
  #allocation0 [shape = 'u32[]', space=smem, size = 0x4, offset = 0x4, fixed_abs, tag = 'smem constant byte address 0x4 - core index']
  #allocation1 [shape = 'u32[72,128]{1,0:T(1,128)}', space=vmem, size = 0x9000, scoped, tag = 'internal scratch']
  #allocation2 [shape = 'f32[8,128]{1,0:T(8,128)}', space=vmem, size = 0x1000, scoped, tag = 'scratch operand']
  %s0 = inlined_call_operand.vmem [shape: f32[8,8], index: 0, kind: input, shape index: {}]
  %s1 = inlined_call_operand.vmem [shape: f32[8,128], index: 1, kind: input, shape index: {}]
  %s2 = inlined_call_operand.vmem [shape: f32[8,1], index: 2, kind: input, shape index: {}]
  %s3 = inlined_call_operand.vmem [shape: f32[1,128], index: 3, kind: input, shape index: {}]
  %s4 = inlined_call_operand.hbm [shape: f32[8,128], index: 4, kind: output, shape index: {}]
  %s5 = sld [smem:[#allocation0]]
  $region34: #{gcn_forward.3} parent=0
    _
  %s7 = ssub.s32 1, %s5
  %s8 = scalar_select 0, %s7, %s5
  $region1: #{gcn_forward.3} parent=0
    #allocation3 [shape = 'u8[4096]{0}', space=vmem, size = 0x1000, scoped, tag = 'output window, operand 0, single buffered']
    #allocation4 [shape = 's32[1]{0}', space=sflag, size = 0x4, scoped, tag = 'scoped memory for gcn_forward.3']
    %9 = vsyncpa [#allocation4], 0
    // Predicated region
    $region2: #{gcn_forward.3} parent=1 // pred_check
      _
    $region3: #{gcn_forward.3} parent=1 // pred_check_branch
      %11 = sbr.rel (0) target = $region5
    $region4: #{gcn_forward.3} parent=1 // pred_region
      _
    $region5: #{gcn_forward.3} parent=1 // pred_fallthru
      _
    // Predicated region
    $region6: #{gcn_forward.3} parent=1 // pred_check
      _
    $region7: #{gcn_forward.3} parent=1 // pred_check_branch
      %13 = sbr.rel (0) target = $region9
    $region8: #{gcn_forward.3} parent=1 // pred_region
      _
    $region9: #{gcn_forward.3} parent=1 // pred_fallthru
      _
    // Predicated region
    $region10: #{gcn_forward.3} parent=1 // pred_check
      _
    $region11: #{gcn_forward.3} parent=1 // pred_check_branch
      %15 = sbr.rel (0) target = $region13
    $region12: #{gcn_forward.3} parent=1 // pred_region
      _
    $region13: #{gcn_forward.3} parent=1 // pred_fallthru
      _
    // Predicated region
    $region14: #{gcn_forward.3} parent=1 // pred_check
      _
    $region15: #{gcn_forward.3} parent=1 // pred_check_branch
      %17 = sbr.rel (0) target = $region17
    $region16: #{gcn_forward.3} parent=1 // pred_region
      _
    $region17: #{gcn_forward.3} parent=1 // pred_fallthru
      _
    %p18 = scmp.eq.s32.totalorder 0, 0
    // Predicated region
    $region18: #{gcn_forward.3} parent=1 // pred_check
      %p19 = pneg %p18
    $region19: #{gcn_forward.3} parent=1 // pred_check_branch
      %21 = sbr.rel (%p19) target = $region21
    $region20: #{gcn_forward.3} parent=1 // pred_region
      %22 = vst [vmem:[#allocation2] sm:$0xff] 0.0
    $region21: #{gcn_forward.3} parent=1 // pred_fallthru
      _
    %v23 = vld [vmem:[#allocation2] sm:$0xff]
    %v24 = vld [vmem:[%s0] sm:$0xff]
    %v25 = vld [vmem:[%s1] sm:$0xff]
    %26 = vxpose.xlu0.b32.start [1/16] %v24, 128
    %27 = vxpose.xlu0.b32.cont [2/16] 0.0, 128
    %28 = vxpose.xlu0.b32.cont [3/16] 0.0, 128
    %29 = vxpose.xlu0.b32.cont [4/16] 0.0, 128
    %30 = vxpose.xlu0.b32.cont [5/16] 0.0, 128
    %31 = vxpose.xlu0.b32.cont [6/16] 0.0, 128
    %32 = vxpose.xlu0.b32.cont [7/16] 0.0, 128
    %33 = vxpose.xlu0.b32.cont [8/16] 0.0, 128
    %34 = vxpose.xlu0.b32.cont [9/16] 0.0, 128
    %35 = vxpose.xlu0.b32.cont [10/16] 0.0, 128
    %36 = vxpose.xlu0.b32.cont [11/16] 0.0, 128
    %37 = vxpose.xlu0.b32.cont [12/16] 0.0, 128
    %38 = vxpose.xlu0.b32.cont [13/16] 0.0, 128
    %39 = vxpose.xlu0.b32.cont [14/16] 0.0, 128
    %40 = vxpose.xlu0.b32.cont [15/16] 0.0, 128
    %41 = vxpose.xlu0.b32.end [16/16] 0.0, 128
    %v42 = vpop.trf.xlu0
    %v43 = vpop.trf.xlu0
    %v44 = vpop.trf.xlu0
    %v45 = vpop.trf.xlu0
    %v46 = vpop.trf.xlu0
    %v47 = vpop.trf.xlu0
    %v48 = vpop.trf.xlu0
    %v49 = vpop.trf.xlu0
    %v50 = vpop.trf.xlu0
    %v51 = vpop.trf.xlu0
    %v52 = vpop.trf.xlu0
    %v53 = vpop.trf.xlu0
    %v54 = vpop.trf.xlu0
    %v55 = vpop.trf.xlu0
    %v56 = vpop.trf.xlu0
    %v57 = vpop.trf.xlu0
    %vm58 = vcmask 64512
    %v60 = vsel %vm58, %v42, 0
    %62 = vmatpush.msra.mxu0 0.0
    %63 = vmatpush.msra.mxu0 0.0
    %64 = vmatpush.msra.mxu0 0.0
    %65 = vmatpush.msra.mxu0 0.0
    %66 = vmatpush.msra.mxu0 0.0
    %67 = vmatpush.msra.mxu0 0.0
    %68 = vmatpush.msra.mxu0 0.0
    %69 = vmatpush.msra.mxu0 0.0
    %70 = vmatpush.msra.mxu0 0.0
    %71 = vmatpush.msra.mxu0 0.0
    %72 = vmatpush.msra.mxu0 0.0
    %73 = vmatpush.msra.mxu0 0.0
    %74 = vmatpush.msra.mxu0 0.0
    %75 = vmatpush.msra.mxu0 0.0
    %76 = vmatpush.msra.mxu0 0.0
    %77 = vmatpush.msra.mxu0 %v25
    %78 = vmatmul.f32.gmra.mxu0 %v60
    %v79 = vpop.f32.mrf.mxu0
    %v80 = vadd.f32 0.0, %v79
    %81 = vdwg.mxu0
    %v82 = vadd.f32 %v23, %v80
    %83 = vst [vmem:[#allocation2] sm:$0xff] %v82
    // Predicated region
    $region22: #{gcn_forward.3} parent=1 // pred_check
      %p84 = pneg %p18
    $region23: #{gcn_forward.3} parent=1 // pred_check_branch
      %86 = sbr.rel (%p84) target = $region25
    $region24: #{gcn_forward.3} parent=1 // pred_region
      %v87 = vld [vmem:[%s2] sm:$0xff]
      %v88 = vld [vmem:[#allocation2] sm:$0xff]
      %90 = vset.pattern.permute.xlu0 0
      %91 = vperm.xlu0 %90, %v87
      %v92 = vpop.permute.xlu0 %91
      %v94 = vmul.f32 %v92, %v88
      %v95 = vld [vmem:[%s3] sm:$0x1]
      %v97 = vperm.slane %v95, 0
      %v99 = vadd.f32 %v94, %v97
      %100 = vst [vmem:[#allocation3] sm:$0xff] %v99
    $region25: #{gcn_forward.3} parent=1 // pred_fallthru
      _
    // Predicated region
    $region26: #{gcn_forward.3} parent=1 // pred_check
      _
    $region27: #{gcn_forward.3} parent=1 // pred_check_branch
      %102 = sbr.rel (0) target = $region29
    $region28: #{gcn_forward.3} parent=1 // pred_region
      %104 = vsyncadd [#allocation4], 0
      %s106 = sshll.u32 [#allocation3], 4
      %s107 = int_to_ptr.vmem [resolvable:$true] %s106
      %s108 = sshll.u32 %s4, 4
      %s109 = int_to_ptr.hbm [resolvable:$true] %s108
      %111 = dma.vmem_to_hbm [thread:$0]  %s107, 128, %s109, [#allocation4]
    $region29: #{gcn_forward.3} parent=1 // pred_fallthru
      _
    // Predicated region
    $region30: #{gcn_forward.3} parent=1 // pred_check
      _
    $region31: #{gcn_forward.3} parent=1 // pred_check_branch
      %113 = sbr.rel (0) target = $region33
    $region32: #{gcn_forward.3} parent=1 // pred_region
      %115 = dma.done [#allocation4], 128
    $region33: #{gcn_forward.3} parent=1 // pred_fallthru
      _
    %116 = vsyncpa [#allocation4], 1

</llo_original>
